<compile_context>
chip_gen: v7x
topology: tpu7x:2x2x1
jax: 0.10.0
libtpu: 0.0.40
codegen_flags: <defaults>
</compile_context>

<pallas_src>
import jax
import jax.numpy as jnp
from jax.experimental import pallas as pl
from jax.experimental.pallas import tpu as pltpu


# ----------------------------------------------------------------------------
# Helpers
# ----------------------------------------------------------------------------
def _round_up(x, m):
    return (x + m - 1) // m * m


def _sublane(itemsize):
    return {4: 8, 2: 16, 1: 32}.get(itemsize, 8)


# ----------------------------------------------------------------------------
# Fused single-pass kernel: layout (nb, C, HW), spatial on lanes
# ----------------------------------------------------------------------------
def _se_fused_kernel(x_ref, w1t_ref, w2t_ref, alpha_ref, o_ref):
    # Global average pool over the spatial (lane) axis, f32 accumulation.
    gap = jnp.mean(x_ref[...], axis=2, dtype=jnp.float32)              # (nb, C)

    # squeeze 1x1 conv: (nb, C) @ (C, C4)
    s = jnp.dot(gap, w1t_ref[...], preferred_element_type=jnp.float32)
    s = jnp.where(s > 0, s, alpha_ref[...] * s)                        # PReLU

    # expand 1x1 conv: (nb, C4) @ (C4, C)
    e = jnp.dot(s, w2t_ref[...], preferred_element_type=jnp.float32)
    gate = jax.nn.sigmoid(e).astype(o_ref.dtype)                       # (nb, C)

    # Broadcast multiply over the spatial (lane) axis in the I/O dtype
    # (matches bf16 execution of the PyTorch module under autocast).
    o_ref[...] = x_ref[...] * gate[:, :, None]


# ----------------------------------------------------------------------------
# Chunked fallback kernels (image too large for a double-buffered VMEM tile)
# ----------------------------------------------------------------------------
def _make_gap_kernel(hw_total, hw_chunk, need_mask):
    def gap_kernel(x_ref, sum_ref):
        c = pl.program_id(1)

        @pl.when(c == 0)
        def _init():
            sum_ref[...] = jnp.zeros_like(sum_ref)

        x = x_ref[...]                                   # (1, C, hw_chunk)
        if need_mask:
            pos = c * hw_chunk + jax.lax.broadcasted_iota(jnp.int32, x.shape, 2)
            x = jnp.where(pos < hw_total, x, jnp.zeros((), x.dtype))
        sum_ref[...] += jnp.sum(x, axis=2, keepdims=True, dtype=jnp.float32)

    return gap_kernel


def _apply_gate_kernel(gate_ref, x_ref, o_ref):
    # gate_ref: (1, C, 1) ; x_ref/o_ref: (1, C, hw_chunk)
    o_ref[...] = x_ref[...] * gate_ref[...].astype(o_ref.dtype)


# ----------------------------------------------------------------------------
# Wrapper
# ----------------------------------------------------------------------------
def se_forward(x, w1, prelu_alpha, w2, *, tile_target_bytes=8 << 20,
               vmem_cap_bytes=None):
    """x: (N, C, H, W) f32/bf16. w1: (C//4, C). w2: (C, C//4).
    prelu_alpha: scalar or (C//4,) vector."""
    N, C, H, W = x.shape
    C4 = w1.shape[0]
    HW = H * W
    dtype = x.dtype
    itemsize = jnp.dtype(dtype).itemsize

    # Reshape only (no HBM data movement) -- spatial axis on lanes.
    x3 = x.reshape(N, C, HW)

    # Tiny pre-transposed weights (f32) and PReLU alpha vector.
    w1t = jnp.asarray(w1, jnp.float32).T                     # (C, C4)
    w2t = jnp.asarray(w2, jnp.float32).T                     # (C4, C)
    alpha = jnp.broadcast_to(
        jnp.asarray(prelu_alpha, jnp.float32).reshape(-1), (C4,)).reshape(1, C4)

    # Device VMEM cap (padding-aware accounting below).
    if vmem_cap_bytes is None:
        try:
            phys = getattr(pltpu.get_tpu_info(), "vmem_capacity_bytes", None)
        except Exception:
            phys = None
        if not phys:
            phys = 64 << 20                                  # conservative (v7x)
        vmem_cap_bytes = int(min(phys * 3 // 4, 100 << 20))

    sub = _sublane(itemsize)
    pad_c = _round_up(C, sub)
    pad_hw = _round_up(HW, 128)
    img_bytes = pad_c * pad_hw * itemsize                    # true VMEM bytes/image

    w_vmem = 2 * 4 * (_round_up(C, 8) * _round_up(C4, 128)
                      + _round_up(C4, 8) * _round_up(C, 128)
                      + 8 * _round_up(C4, 128))              # dbl-buffered f32 weights
    slack = 2 << 20

    def fused_vmem(nb_):
        # in + out double-buffered, plus one tile of elementwise headroom.
        return 5 * nb_ * img_bytes + w_vmem + slack

    nb = int(max(1, min(N, tile_target_bytes // max(img_bytes, 1))))
    while nb > 1 and fused_vmem(nb) > vmem_cap_bytes:
        nb -= 1

    if fused_vmem(nb) <= vmem_cap_bytes:
        # -------------------- single-pass fused path --------------------
        if pl.cdiv(N, nb) == 1 and N > 1:
            nb = pl.cdiv(N, 2)           # give both v7x TensorCores a block
        grid = (pl.cdiv(N, nb),)

        cost = pl.CostEstimate(
            flops=2 * N * C * HW + 4 * N * C * C4,
            transcendentals=N * C,
            bytes_accessed=2 * N * C * HW * itemsize + 8 * C * C4,
        )

        out = pl.pallas_call(
            _se_fused_kernel,
            out_shape=jax.ShapeDtypeStruct((N, C, HW), dtype),
            grid_spec=pltpu.PrefetchScalarGridSpec(
                num_scalar_prefetch=0,
                grid=grid,
                in_specs=[
                    pl.BlockSpec((nb, C, HW), lambda n: (n, 0, 0)),   # x tile
                    pl.BlockSpec((C, C4), lambda n: (0, 0)),          # squeeze W^T
                    pl.BlockSpec((C4, C), lambda n: (0, 0)),          # expand W^T
                    pl.BlockSpec((1, C4), lambda n: (0, 0)),          # PReLU alpha
                ],
                out_specs=pl.BlockSpec((nb, C, HW), lambda n: (n, 0, 0)),
            ),
            compiler_params=pltpu.CompilerParams(
                dimension_semantics=("parallel",),
                vmem_limit_bytes=int(vmem_cap_bytes),
            ),
            cost_estimate=cost,
        )(x3, w1t, w2t, alpha)
        return out.reshape(N, C, H, W)

    # -------------------- chunked fallback (very large images) --------------------
    # Two passes over x (1.5x HBM traffic vs fused), but compiles on any VMEM size.
    chunk_budget = max(128 * pad_c * itemsize,
                       (vmem_cap_bytes - w_vmem - slack) // 8)
    hw_chunk = max(128, (chunk_budget // (pad_c * itemsize)) // 128 * 128)
    hw_chunk = min(hw_chunk, pad_hw)
    if HW % hw_chunk:
        # Prefer a lane-aligned chunk that divides HW (avoids edge masking),
        # but don't shrink the chunk by more than 2x for it.
        for cand in range(hw_chunk, max(hw_chunk // 2, 128) - 1, -128):
            if HW % cand == 0:
                hw_chunk = cand
                break
    n_chunks = pl.cdiv(HW, hw_chunk)
    need_mask = (HW % hw_chunk) != 0

    # Pass 1: per-image channel sums (GAP numerator), accumulated across chunks.
    sums = pl.pallas_call(
        _make_gap_kernel(HW, hw_chunk, need_mask),
        out_shape=jax.ShapeDtypeStruct((N, C, 1), jnp.float32),
        grid_spec=pltpu.PrefetchScalarGridSpec(
            num_scalar_prefetch=0,
            grid=(N, n_chunks),
            in_specs=[pl.BlockSpec((1, C, hw_chunk), lambda n, c: (n, 0, c))],
            out_specs=pl.BlockSpec((1, C, 1), lambda n, c: (n, 0, 0)),
        ),
        compiler_params=pltpu.CompilerParams(
            dimension_semantics=("parallel", "arbitrary")),
    )(x3)

    # Tiny gate math (N x C) in plain JAX -- negligible next to the x passes.
    gap = sums[:, :, 0] * (1.0 / HW)                          # (N, C) f32
    s = gap @ w1t                                             # (N, C4)
    s = jnp.where(s > 0, s, alpha * s)                        # PReLU
    gate3 = jax.nn.sigmoid(s @ w2t).astype(dtype).reshape(N, C, 1)

    # Pass 2: apply the gate chunk by chunk.
    out = pl.pallas_call(
        _apply_gate_kernel,
        out_shape=jax.ShapeDtypeStruct((N, C, HW), dtype),
        grid_spec=pltpu.PrefetchScalarGridSpec(
            num_scalar_prefetch=0,
            grid=(N, n_chunks),
            in_specs=[
                pl.BlockSpec((1, C, 1), lambda n, c: (n, 0, 0)),        # gate
                pl.BlockSpec((1, C, hw_chunk), lambda n, c: (n, 0, c)),  # x chunk
            ],
            out_specs=pl.BlockSpec((1, C, hw_chunk), lambda n, c: (n, 0, c)),
        ),
        compiler_params=pltpu.CompilerParams(
            dimension_semantics=("parallel", "parallel")),
    )(gate3, x3)
    return out.reshape(N, C, H, W)


# ----------------------------------------------------------------------------
# Pure-JAX reference of the PyTorch forward
# ----------------------------------------------------------------------------
def se_reference(x, w1, prelu_alpha, w2):
    gap = jnp.mean(x.astype(jnp.float32), axis=(2, 3))        # (N, C)
    s = gap @ w1.T                                            # (N, C//4)
    s = jnp.where(s > 0, s, prelu_alpha * s)
    e = s @ w2.T                                              # (N, C)
    w = jax.nn.sigmoid(e)[:, :, None, None]
    return x.astype(jnp.float32) * w


if __name__ == "__main__":
    key = jax.random.PRNGKey(0)
    prelu_alpha = jnp.float32(0.25)                           # PyTorch default

    # --- Case 1: small early-stage SE shape, f32, fused path -----------------
    N, C, H, W = 2, 8, 16, 16
    C4 = C // 4
    kx, k1, k2, key = jax.random.split(key, 4)
    x = jax.random.normal(kx, (N, C, H, W), dtype=jnp.float32)
    w1 = jax.random.normal(k1, (C4, C), dtype=jnp.float32) * 0.1
    w2 = jax.random.normal(k2, (C, C4), dtype=jnp.float32) * 0.1
    out = jax.block_until_ready(se_forward(x, w1, prelu_alpha, w2))
    ref = se_reference(x, w1, prelu_alpha, w2)
    assert out.shape == (N, C, H, W)
    assert jnp.allclose(out, ref, atol=1e-5, rtol=1e-5), "mismatch (case 1)"

    # --- Case 2: batch not divisible by block (cdiv grid, partial last block) --
    N2 = 3
    kx, key = jax.random.split(key)
    xb = jax.random.normal(kx, (N2, C, H, W), dtype=jnp.float32)
    out_b = jax.block_until_ready(
        se_forward(xb, w1, prelu_alpha, w2, tile_target_bytes=16 * 1024))
    ref_b = se_reference(xb, w1, prelu_alpha, w2)
    assert jnp.allclose(out_b, ref_b, atol=1e-5, rtol=1e-5), "mismatch (case 2)"

    # --- Case 3: late-stage shape (HW=49, masked stores), f32, fused path ----
    N, C, H, W = 2, 128, 7, 7
    C4 = C // 4
    kx, k1, k2, key = jax.random.split(key, 4)
    x2 = jax.random.normal(kx, (N, C, H, W), dtype=jnp.float32)
    w1b = jax.random.normal(k1, (C4, C), dtype=jnp.float32) * 0.1
    w2b = jax.random.normal(k2, (C, C4), dtype=jnp.float32) * 0.1
    out2 = jax.block_until_ready(se_forward(x2, w1b, prelu_alpha, w2b))
    ref2 = se_reference(x2, w1b, prelu_alpha, w2b)
    assert jnp.allclose(out2, ref2, atol=5e-3, rtol=5e-3), "mismatch (case 3)"

    # --- Case 4: bf16 I/O (half the HBM traffic), gate math stays in f32 -----
    x_bf = x2.astype(jnp.bfloat16)
    out_bf = jax.block_until_ready(se_forward(x_bf, w1b, prelu_alpha, w2b))
    ref_bf = se_reference(x_bf, w1b, prelu_alpha, w2b)
    assert out_bf.dtype == jnp.bfloat16
    assert jnp.allclose(out_bf.astype(jnp.float32), ref_bf,
                        atol=5e-2, rtol=5e-2), "mismatch (case 4, bf16)"

    # --- Case 5: force the chunked-HW fallback via a tiny VMEM cap -----------
    N, C, H, W = 2, 8, 64, 64
    C4 = C // 4
    kx, k1, k2, key = jax.random.split(key, 4)
    x3_ = jax.random.normal(kx, (N, C, H, W), dtype=jnp.float32)
    w1c = jax.random.normal(k1, (C4, C), dtype=jnp.float32) * 0.1
    w2c = jax.random.normal(k2, (C, C4), dtype=jnp.float32) * 0.1
    out3 = jax.block_until_ready(
        se_forward(x3_, w1c, prelu_alpha, w2c, vmem_cap_bytes=1 << 20))
    ref3 = se_reference(x3_, w1c, prelu_alpha, w2c)
    assert jnp.allclose(out3, ref3, atol=1e-4, rtol=1e-4), "mismatch (case 5)"

    print("KERNEL_OK")
</pallas_src>

<mosaic_0001>
module attributes {stable_mosaic.version = 11 : i64} {
  func.func @_se_fused_kernel(%arg0: i32, %arg1: memref<1x8x256xf32, #tpu.memory_space<vmem>>, %arg2: memref<8x2xf32, #tpu.memory_space<vmem>>, %arg3: memref<2x8xf32, #tpu.memory_space<vmem>>, %arg4: memref<1x2xf32, #tpu.memory_space<vmem>>, %arg5: memref<1x8x256xf32, #tpu.memory_space<vmem>>) attributes {dimension_semantics = [#tpu.dimension_semantics<parallel>], iteration_bounds = array<i64: 2>, scalar_prefetch = 0 : i64, scratch_operands = 0 : i64, tpu.core_type = #tpu.core_type<tc>, window_params = [{transform_indices = @transform_0, window_bounds = array<i64: 1, 8, 256>}, {pipeline_mode = #tpu.pipeline_mode<synchronous>, transform_indices = @transform_1, window_bounds = array<i64: 8, 2>}, {pipeline_mode = #tpu.pipeline_mode<synchronous>, transform_indices = @transform_2, window_bounds = array<i64: 2, 8>}, {pipeline_mode = #tpu.pipeline_mode<synchronous>, transform_indices = @transform_3, window_bounds = array<i64: 1, 2>}, {transform_indices = @transform_4, window_bounds = array<i64: 1, 8, 256>}]} {
    %c0 = arith.constant 0 : index
    %c0_0 = arith.constant 0 : index
    %c0_1 = arith.constant 0 : index
    %0 = vector.load %arg1[%c0, %c0_0, %c0_1] : memref<1x8x256xf32, #tpu.memory_space<vmem>>, vector<1x8x256xf32>
    %cst = arith.constant dense<0.000000e+00> : vector<1x8xf32>
    %1 = vector.multi_reduction <add>, %0, %cst [2] : vector<1x8x256xf32> to vector<1x8xf32>
    %cst_2 = arith.constant 2.560000e+02 : f32
    %2 = vector.broadcast %cst_2 : f32 to vector<1x8xf32>
    %3 = arith.divf %1, %2 : vector<1x8xf32>
    %c0_3 = arith.constant 0 : index
    %c0_4 = arith.constant 0 : index
    %4 = vector.load %arg2[%c0_3, %c0_4] : memref<8x2xf32, #tpu.memory_space<vmem>>, vector<8x2xf32>
    %cst_5 = arith.constant dense<0.000000e+00> : vector<1x2xf32>
    %5 = tpu.matmul %3, %4, %cst_5 {dimension_numbers = #tpu.dot_dimension_numbers<[1], [0], [0], [1], [0, 0, 1, 1], [], []>} : vector<1x8xf32>, vector<8x2xf32>, vector<1x2xf32> -> vector<1x2xf32>
    %cst_6 = arith.constant 0.000000e+00 : f32
    %6 = vector.broadcast %cst_6 : f32 to vector<1x2xf32>
    %7 = arith.cmpf ogt, %5, %6 : vector<1x2xf32>
    %c0_7 = arith.constant 0 : index
    %c0_8 = arith.constant 0 : index
    %8 = vector.load %arg4[%c0_7, %c0_8] : memref<1x2xf32, #tpu.memory_space<vmem>>, vector<1x2xf32>
    %9 = arith.mulf %8, %5 : vector<1x2xf32>
    %10 = arith.select %7, %5, %9 : vector<1x2xi1>, vector<1x2xf32>
    %c0_9 = arith.constant 0 : index
    %c0_10 = arith.constant 0 : index
    %11 = vector.load %arg3[%c0_9, %c0_10] : memref<2x8xf32, #tpu.memory_space<vmem>>, vector<2x8xf32>
    %cst_11 = arith.constant dense<0.000000e+00> : vector<1x8xf32>
    %12 = tpu.matmul %10, %11, %cst_11 {dimension_numbers = #tpu.dot_dimension_numbers<[1], [0], [0], [1], [0, 0, 1, 1], [], []>} : vector<1x2xf32>, vector<2x8xf32>, vector<1x8xf32> -> vector<1x8xf32>
    %13 = arith.negf %12 : vector<1x8xf32>
    %14 = math.exp %13 : vector<1x8xf32>
    %cst_12 = arith.constant 1.000000e+00 : f32
    %15 = vector.broadcast %cst_12 : f32 to vector<1x8xf32>
    %16 = arith.addf %15, %14 : vector<1x8xf32>
    %17 = arith.divf %15, %16 : vector<1x8xf32>
    %c0_13 = arith.constant 0 : index
    %c0_14 = arith.constant 0 : index
    %c0_15 = arith.constant 0 : index
    %18 = vector.load %arg1[%c0_13, %c0_14, %c0_15] : memref<1x8x256xf32, #tpu.memory_space<vmem>>, vector<1x8x256xf32>
    %19 = vector.shape_cast %17 : vector<1x8xf32> to vector<1x8x1xf32>
    %20 = vector.broadcast %19 : vector<1x8x1xf32> to vector<1x8x256xf32>
    %21 = arith.mulf %18, %20 : vector<1x8x256xf32>
    %c0_16 = arith.constant 0 : index
    %c0_17 = arith.constant 0 : index
    %c0_18 = arith.constant 0 : index
    %22 = vector.load %arg5[%c0_16, %c0_17, %c0_18] : memref<1x8x256xf32, #tpu.memory_space<vmem>>, vector<1x8x256xf32>
    tpu.vector_store %arg5[%c0_16, %c0_17, %c0_18], %21 {strides = array<i32>} : memref<1x8x256xf32, #tpu.memory_space<vmem>>, vector<1x8x256xf32>,
    return
  }
  func.func @transform_0(%arg0: i32) -> (i32, i32, i32) {
    %c0_i32 = arith.constant 0 : i32
    %c0_i32_0 = arith.constant 0 : i32
    %c0_i32_1 = arith.constant 0 : i32
    return %arg0, %c0_i32, %c0_i32_0 : i32, i32, i32
  }
  func.func @transform_1(%arg0: i32) -> (i32, i32) {
    %c0_i32 = arith.constant 0 : i32
    %c0_i32_0 = arith.constant 0 : i32
    %c0_i32_1 = arith.constant 0 : i32
    return %c0_i32, %c0_i32_0 : i32, i32
  }
  func.func @transform_2(%arg0: i32) -> (i32, i32) {
    %c0_i32 = arith.constant 0 : i32
    %c0_i32_0 = arith.constant 0 : i32
    %c0_i32_1 = arith.constant 0 : i32
    return %c0_i32, %c0_i32_0 : i32, i32
  }
  func.func @transform_3(%arg0: i32) -> (i32, i32) {
    %c0_i32 = arith.constant 0 : i32
    %c0_i32_0 = arith.constant 0 : i32
    %c0_i32_1 = arith.constant 0 : i32
    return %c0_i32, %c0_i32_0 : i32, i32
  }
  func.func @transform_4(%arg0: i32) -> (i32, i32, i32) {
    %c0_i32 = arith.constant 0 : i32
    %c0_i32_0 = arith.constant 0 : i32
    %c0_i32_1 = arith.constant 0 : i32
    return %arg0, %c0_i32, %c0_i32_0 : i32, i32, i32
  }
}

</mosaic_0001>

<llo_original>
// kernel: tpu_custom_call.1
$region0: #{tpu_custom_call.1}
  #allocation0 [shape = 'u32[]', space=smem, size = 0x4, offset = 0x4, fixed_abs, tag = 'smem constant byte address 0x4 - core index']
  #allocation1 [shape = 'u32[144,128]{1,0:T(1,128)}', space=vmem, size = 0x12000, scoped, tag = 'internal scratch']
  %s0 = inlined_call_operand.hbm [shape: f32[2,8,256], index: 0, kind: input, shape index: {}]
  %s1 = inlined_call_operand.vmem [shape: f32[8,2], index: 1, kind: input, shape index: {}]
  %s2 = inlined_call_operand.vmem [shape: f32[2,8], index: 2, kind: input, shape index: {}]
  %s3 = inlined_call_operand.vmem [shape: f32[1,2], index: 3, kind: input, shape index: {}]
  %s4 = inlined_call_operand.hbm [shape: f32[2,8,256], index: 4, kind: output, shape index: {}]
  %s5 = sld [smem:[#allocation0]]
  $region53: #{tpu_custom_call.1} parent=0
    _
  %s7 = ssub.s32 1, %s5
  %s8 = scalar_select 0, %s7, %s5
  $region1: #{tpu_custom_call.1} parent=0
    #allocation2 [shape = 'u8[16384]{0}', space=vmem, size = 0x4000, scoped, tag = 'input window, operand 0']
    #allocation3 [shape = 's32[2]{0}', space=sflag, size = 0x8, scoped, tag = 'scoped memory for tpu_custom_call.1']
    #allocation4 [shape = 's32[2]{0}', space=sflag, size = 0x8, scoped, tag = 'scoped memory for tpu_custom_call.1']
    #allocation5 [shape = 'u8[16384]{0}', space=vmem, size = 0x4000, scoped, tag = 'output window, operand 0']
    %9 = vsyncpa [#allocation3], 0
    %s10 = scalar_lea.sflag [#allocation3], 1
    %11 = vsyncpa %s10, 0
    %12 = vsyncpa [#allocation4], 0
    %s13 = scalar_lea.sflag [#allocation4], 1
    %14 = vsyncpa %s13, 0
    loop: start=0, step=1, limit=4
    $region2: #{tpu_custom_call.1} parent=1 // loop_pre_header
      _
    $region3: #{tpu_custom_call.1} parent=1 // loop_header
      %s16 = sphi 0, %s20
      %p17 = scmp.ge.s32.totalorder %s16, 4
      %s26 = sphi 0, %s28
      %s29 = sphi 0, %s26
      %s30 = sphi 0, %s29
      %s46 = sphi 0, %s30
      %s50 = sphi 0, %s50
      %s52 = sphi 0, %s50
      %s53 = sphi 0, %s52
      %s67 = sphi 0, %s53
      %s71 = sphi 0, %s71
      %s73 = sphi 0, %s71
      %s74 = sphi 0, %s73
      %s88 = sphi 0, %s74
      %s92 = sphi 0, %s92
      %s94 = sphi 0, %s92
      %s95 = sphi 0, %s94
      %s109 = sphi 0, %s95
      %s115 = sphi 0, %s117
      %s118 = sphi 0, %s115
      %s119 = sphi 0, %s118
      %s135 = sphi 0, %s119
    $region4: #{tpu_custom_call.1} parent=1 // loop_header_branch
      %19 = sbr.rel (%p17) target = $region8
    $region5: #{tpu_custom_call.1} parent=1 // loop_body
      %s21 = ssub.s32 %s16, 1
      %s22 = ssub.s32 %s16, 2
      %s23 = sadd.s32 %s16, 1
      %s24 = ssub.s32 %s16, %s23
      %p25 = scmp.eq.s32.totalorder %s24, 0
      %s27 = sadd.s32 %s26, 1
      %s28 = scalar_select %p25, %s26, %s27
      %p31 = pneg %p25
      %p32 = scmp.eq.s32.totalorder %s16, 1
      %p33 = por %p31, %p32
      %p34 = scmp.ne.s32.totalorder %s26, %s29
      %p35 = scmp.eq.s32.totalorder %s16, 0
      %p36 = por %p34, %p35
      %p37 = scmp.ne.s32.totalorder %s26, %s29
      %p38 = scmp.eq.s32.totalorder %s21, 1
      %p39 = por %p37, %p38
      %p40 = scmp.ne.s32.totalorder %s29, %s30
      %p41 = scmp.eq.s32.totalorder %s21, 0
      %p42 = por %p40, %p41
      %p43 = scmp.ne.s32.totalorder %s29, %s30
      %p44 = scmp.eq.s32.totalorder %s22, 1
      %p45 = por %p43, %p44
      %p47 = scmp.ne.s32.totalorder %s30, %s46
      %p48 = scmp.eq.s32.totalorder %s22, 0
      %p49 = por %p47, %p48
      %s51 = sadd.s32 %s50, 1
      %p54 = scmp.eq.s32.totalorder %s16, 1
      %p55 = scmp.ne.s32.totalorder %s50, %s52
      %p56 = scmp.eq.s32.totalorder %s16, 0
      %p57 = por %p55, %p56
      %p58 = scmp.ne.s32.totalorder %s50, %s52
      %p59 = scmp.eq.s32.totalorder %s21, 1
      %p60 = por %p58, %p59
      %p61 = scmp.ne.s32.totalorder %s52, %s53
      %p62 = scmp.eq.s32.totalorder %s21, 0
      %p63 = por %p61, %p62
      %p64 = scmp.ne.s32.totalorder %s52, %s53
      %p65 = scmp.eq.s32.totalorder %s22, 1
      %p66 = por %p64, %p65
      %p68 = scmp.ne.s32.totalorder %s53, %s67
      %p69 = scmp.eq.s32.totalorder %s22, 0
      %p70 = por %p68, %p69
      %s72 = sadd.s32 %s71, 1
      %p75 = scmp.eq.s32.totalorder %s16, 1
      %p76 = scmp.ne.s32.totalorder %s71, %s73
      %p77 = scmp.eq.s32.totalorder %s16, 0
      %p78 = por %p76, %p77
      %p79 = scmp.ne.s32.totalorder %s71, %s73
      %p80 = scmp.eq.s32.totalorder %s21, 1
      %p81 = por %p79, %p80
      %p82 = scmp.ne.s32.totalorder %s73, %s74
      %p83 = scmp.eq.s32.totalorder %s21, 0
      %p84 = por %p82, %p83
      %p85 = scmp.ne.s32.totalorder %s73, %s74
      %p86 = scmp.eq.s32.totalorder %s22, 1
      %p87 = por %p85, %p86
      %p89 = scmp.ne.s32.totalorder %s74, %s88
      %p90 = scmp.eq.s32.totalorder %s22, 0
      %p91 = por %p89, %p90
      %s93 = sadd.s32 %s92, 1
      %p96 = scmp.eq.s32.totalorder %s16, 1
      %p97 = scmp.ne.s32.totalorder %s92, %s94
      %p98 = scmp.eq.s32.totalorder %s16, 0
      %p99 = por %p97, %p98
      %p100 = scmp.ne.s32.totalorder %s92, %s94
      %p101 = scmp.eq.s32.totalorder %s21, 1
      %p102 = por %p100, %p101
      %p103 = scmp.ne.s32.totalorder %s94, %s95
      %p104 = scmp.eq.s32.totalorder %s21, 0
      %p105 = por %p103, %p104
      %p106 = scmp.ne.s32.totalorder %s94, %s95
      %p107 = scmp.eq.s32.totalorder %s22, 1
      %p108 = por %p106, %p107
      %p110 = scmp.ne.s32.totalorder %s95, %s109
      %p111 = scmp.eq.s32.totalorder %s22, 0
      %p112 = por %p110, %p111
      %s113 = ssub.s32 %s16, %s23
      %p114 = scmp.eq.s32.totalorder %s113, 0
      %s116 = sadd.s32 %s115, 1
      %s117 = scalar_select %p114, %s115, %s116
      %p120 = pneg %p114
      %p121 = scmp.eq.s32.totalorder %s16, 1
      %p122 = por %p120, %p121
      %p123 = scmp.ne.s32.totalorder %s115, %s118
      %p124 = scmp.eq.s32.totalorder %s16, 0
      %p125 = por %p123, %p124
      %p126 = scmp.ne.s32.totalorder %s115, %s118
      %p127 = scmp.eq.s32.totalorder %s21, 1
      %p128 = por %p126, %p127
      %p129 = scmp.ne.s32.totalorder %s118, %s119
      %p130 = scmp.eq.s32.totalorder %s21, 0
      %p131 = por %p129, %p130
      %p132 = scmp.ne.s32.totalorder %s118, %s119
      %p133 = scmp.eq.s32.totalorder %s22, 1
      %p134 = por %p132, %p133
      %p136 = scmp.ne.s32.totalorder %s119, %s135
      %p137 = scmp.eq.s32.totalorder %s22, 0
      %p138 = por %p136, %p137
      %p139 = scmp.le.s32.totalorder 1, %s16
      %p140 = scmp.lt.s32.totalorder %s16, 3
      %p141 = pnand %p139, %p140
      %p142 = pneg %p141
      // Predicated region
      $region9: #{tpu_custom_call.1} parent=5 // pred_check
        _
      $region10: #{tpu_custom_call.1} parent=5 // pred_check_branch
        %144 = sbr.rel (%p141) target = $region12
      $region11: #{tpu_custom_call.1} parent=5 // pred_region
        %s145 = ssub.s32 %s16, 1
        // Predicated region
        $region13: #{tpu_custom_call.1} parent=11 // pred_check
          %p146 = pneg %p63
        $region14: #{tpu_custom_call.1} parent=11 // pred_check_branch
          %148 = sbr.rel (%p146) target = $region16
        $region15: #{tpu_custom_call.1} parent=11 // pred_region
          _
        $region16: #{tpu_custom_call.1} parent=11 // pred_fallthru
          _
        // Predicated region
        $region17: #{tpu_custom_call.1} parent=11 // pred_check
          %p149 = pneg %p84
        $region18: #{tpu_custom_call.1} parent=11 // pred_check_branch
          %151 = sbr.rel (%p149) target = $region20
        $region19: #{tpu_custom_call.1} parent=11 // pred_region
          _
        $region20: #{tpu_custom_call.1} parent=11 // pred_fallthru
          _
        // Predicated region
        $region21: #{tpu_custom_call.1} parent=11 // pred_check
          %p152 = pneg %p105
        $region22: #{tpu_custom_call.1} parent=11 // pred_check_branch
          %154 = sbr.rel (%p152) target = $region24
        $region23: #{tpu_custom_call.1} parent=11 // pred_region
          _
        $region24: #{tpu_custom_call.1} parent=11 // pred_fallthru
          _
      $region12: #{tpu_custom_call.1} parent=5 // pred_fallthru
        _
      %p155 = scmp.lt.s32.totalorder %s16, 2
      // Predicated region
      $region25: #{tpu_custom_call.1} parent=5 // pred_check
        %p156 = pneg %p155
      $region26: #{tpu_custom_call.1} parent=5 // pred_check_branch
        %158 = sbr.rel (%p156) target = $region28
      $region27: #{tpu_custom_call.1} parent=5 // pred_region
        // Predicated region
        $region29: #{tpu_custom_call.1} parent=27 // pred_check
          %p159 = pneg %p36
        $region30: #{tpu_custom_call.1} parent=27 // pred_check_branch
          %161 = sbr.rel (%p159) target = $region32
        $region31: #{tpu_custom_call.1} parent=27 // pred_region
          %s162 = sand.u32 %s26, 1
          %s163 = scalar_lea.sflag [#allocation3], %s162
          %s164 = sand.u32 %s26, 1
          %s165 = smul.addr %s164, 16
          %s166 = scalar_lea.vmem [#allocation2], %s165
          %s168 = ssub.s32 256, 256
          %169 = vsyncadd %s163, %s168
          %s170 = smul.addr %s16, 2
          %s171 = smul.addr %s170, 128
          %s172 = scalar_lea.hbm %s0, %s171
          %s174 = sshll.u32 %s166, 4
          %s175 = int_to_ptr.vmem [resolvable:$true] %s174
          %177 = dma.hbm_to_vmem [thread:$0]  %s172, 256, %s175, %s163
        $region32: #{tpu_custom_call.1} parent=27 // pred_fallthru
          _
      $region28: #{tpu_custom_call.1} parent=5 // pred_fallthru
        _
      %p178 = scmp.le.s32.totalorder 1, %s16
      %p179 = scmp.lt.s32.totalorder %s16, 3
      %p180 = pnand %p178, %p179
      %p181 = pneg %p180
      // Predicated region
      $region33: #{tpu_custom_call.1} parent=5 // pred_check
        _
      $region34: #{tpu_custom_call.1} parent=5 // pred_check_branch
        %183 = sbr.rel (%p180) target = $region36
      $region35: #{tpu_custom_call.1} parent=5 // pred_region
        %s184 = ssub.s32 %s16, 1
        %s185 = sand.u32 %s29, 1
        %s186 = scalar_lea.sflag [#allocation3], %s185
        %s187 = sand.u32 %s29, 1
        %s188 = smul.addr %s187, 16
        %s189 = scalar_lea.vmem [#allocation2], %s188
        // Predicated region
        $region37: #{tpu_custom_call.1} parent=35 // pred_check
          %p190 = pneg %p42
        $region38: #{tpu_custom_call.1} parent=35 // pred_check_branch
          %192 = sbr.rel (%p190) target = $region40
        $region39: #{tpu_custom_call.1} parent=35 // pred_region
          %193 = dma.done %s186, 256
        $region40: #{tpu_custom_call.1} parent=35 // pred_fallthru
          _
        %s194 = sand.u32 %s29, 1
        %s195 = scalar_lea.sflag [#allocation3], %s194
        %s196 = sand.u32 %s29, 1
        %s197 = smul.addr %s196, 16
        %s198 = scalar_lea.vmem [#allocation2], %s197
        %p199 = pneg %p42
        %p200 = pneg %p39
        %p201 = pneg %p63
        %p202 = pneg %p60
        %p203 = pneg %p84
        %p204 = pneg %p81
        %p205 = pneg %p105
        %p206 = pneg %p102
        %p207 = pneg %p131
        %p208 = pneg %p128
        %s209 = sand.u32 %s118, 1
        %s210 = scalar_lea.sflag [#allocation4], %s209
        %s211 = sand.u32 %s118, 1
        %s212 = smul.addr %s211, 16
        %s213 = scalar_lea.vmem [#allocation5], %s212
        %v214 = vld [vmem:[%s189] sm:$0xff]
        %v215 = vld [vmem:[%s189 + $0x8] sm:$0xff]
        %v216 = vadd.f32 %v214, %v215
        %217 = vadd.xlane.f32.xlu0 %v216
        %v218 = vpop.xlane.xlu0 %217
        %v219 = vrcp.pop 256.0
        %v220 = vmul.f32 %v218, %v219
        %v221 = vld [vmem:[%s1] sm:$0xff]
        %v223 = vlaneseq
        %v224 = vand.u32 %v223, 127
        %v225 = vlaneseq
        %v226 = vshrl.u32 %v225, 7
        %v227 = vsub.s32 %v224, %v226
        %v228 = vrot.slane %v220, %v227
        %vm229 = vcmask 64512
        %v230 = vsel %vm229, %v228, 0
        %232 = vmatprep.subr.mxu0 0.0
        %233 = vmatpush1.msra.mxu0 %v221
        %234 = vmatprep.subr.mxu0 0.0
        %235 = vmatpush1.msra.mxu0 0.0
        %236 = vmatprep.subr.mxu0 0.0
        %237 = vmatpush1.msra.mxu0 0.0
        %238 = vmatprep.subr.mxu0 0.0
        %239 = vmatpush1.msra.mxu0 0.0
        %240 = vmatprep.subr.mxu0 0.0
        %241 = vmatpush1.msra.mxu0 0.0
        %242 = vmatprep.subr.mxu0 0.0
        %243 = vmatpush1.msra.mxu0 0.0
        %244 = vmatprep.subr.mxu0 0.0
        %245 = vmatpush1.msra.mxu0 0.0
        %246 = vmatprep.subr.mxu0 0.0
        %247 = vmatpush1.msra.mxu0 0.0
        %248 = vmatprep.subr.mxu0 0.0
        %249 = vmatpush1.msra.mxu0 0.0
        %250 = vmatprep.subr.mxu0 0.0
        %251 = vmatpush1.msra.mxu0 0.0
        %252 = vmatprep.subr.mxu0 0.0
        %253 = vmatpush1.msra.mxu0 0.0
        %254 = vmatprep.subr.mxu0 0.0
        %255 = vmatpush1.msra.mxu0 0.0
        %256 = vmatprep.subr.mxu0 0.0
        %257 = vmatpush1.msra.mxu0 0.0
        %258 = vmatprep.subr.mxu0 0.0
        %259 = vmatpush1.msra.mxu0 0.0
        %260 = vmatprep.subr.mxu0 0.0
        %261 = vmatpush1.msra.mxu0 0.0
        %262 = vmatprep.subr.mxu0 0.0
        %263 = vmatpush1.msra.mxu0 0.0
        %264 = vmatprep.subr.mxu0 0.0
        %265 = vmatpush1.msra.mxu0 0.0
        %266 = vmatprep.subr.mxu0 0.0
        %267 = vmatpush1.msra.mxu0 0.0
        %268 = vmatprep.subr.mxu0 0.0
        %269 = vmatpush1.msra.mxu0 0.0
        %270 = vmatprep.subr.mxu0 0.0
        %271 = vmatpush1.msra.mxu0 0.0
        %272 = vmatprep.subr.mxu0 0.0
        %273 = vmatpush1.msra.mxu0 0.0
        %274 = vmatprep.subr.mxu0 0.0
        %275 = vmatpush1.msra.mxu0 0.0
        %276 = vmatprep.subr.mxu0 0.0
        %277 = vmatpush1.msra.mxu0 0.0
        %278 = vmatprep.subr.mxu0 0.0
        %279 = vmatpush1.msra.mxu0 0.0
        %280 = vmatprep.subr.mxu0 0.0
        %281 = vmatpush1.msra.mxu0 0.0
        %282 = vmatprep.subr.mxu0 0.0
        %283 = vmatpush1.msra.mxu0 0.0
        %284 = vmatprep.subr.mxu0 0.0
        %285 = vmatpush1.msra.mxu0 0.0
        %286 = vmatprep.subr.mxu0 0.0
        %287 = vmatpush1.msra.mxu0 0.0
        %288 = vmatprep.subr.mxu0 0.0
        %289 = vmatpush1.msra.mxu0 0.0
        %290 = vmatprep.subr.mxu0 0.0
        %291 = vmatpush1.msra.mxu0 0.0
        %292 = vmatprep.subr.mxu0 0.0
        %293 = vmatpush1.msra.mxu0 0.0
        %294 = vmatprep.subr.mxu0 0.0
        %295 = vmatpush1.msra.mxu0 0.0
        %296 = vmatprep.mubr.f32.mxu0 0.0
        %297 = vmatmul.mubr.f32.gmra.mrb[0].mxu0 %v230
        %v298 = vpop.f32.mrb[0].mxu0
        %v299 = vadd.f32 0.0, %v298
        %v300 = vpop.f32.mrb[0].mxu0
        %301 = vdwg.mxu0
        %vm302 = vcmp.gt.f32.partialorder %v299, 0.0
        %v303 = vld [vmem:[%s3] sm:$0x1]
        %v304 = vmul.f32 %v303, %v299
        %v305 = vsel %vm302, %v299, %v304
        %v306 = vld [vmem:[%s2] sm:$0x3]
        %vm307 = vcmask 15360
        %v309 = vsel %vm307, %v305, 0
        %vm311 = vcmask 1041408
        %v313 = vsel %vm311, %v306, 0
        %315 = vmatprep.subr.mxu0 0.0
        %316 = vmatpush1.msra.mxu0 %v313
        %317 = vmatprep.subr.mxu0 0.0
        %318 = vmatpush1.msra.mxu0 0.0
        %319 = vmatprep.subr.mxu0 0.0
        %320 = vmatpush1.msra.mxu0 0.0
        %321 = vmatprep.subr.mxu0 0.0
        %322 = vmatpush1.msra.mxu0 0.0
        %323 = vmatprep.subr.mxu0 0.0
        %324 = vmatpush1.msra.mxu0 0.0
        %325 = vmatprep.subr.mxu0 0.0
        %326 = vmatpush1.msra.mxu0 0.0
        %327 = vmatprep.subr.mxu0 0.0
        %328 = vmatpush1.msra.mxu0 0.0
        %329 = vmatprep.subr.mxu0 0.0
        %330 = vmatpush1.msra.mxu0 0.0
        %331 = vmatprep.subr.mxu0 0.0
        %332 = vmatpush1.msra.mxu0 0.0
        %333 = vmatprep.subr.mxu0 0.0
        %334 = vmatpush1.msra.mxu0 0.0
        %335 = vmatprep.subr.mxu0 0.0
        %336 = vmatpush1.msra.mxu0 0.0
        %337 = vmatprep.subr.mxu0 0.0
        %338 = vmatpush1.msra.mxu0 0.0
        %339 = vmatprep.subr.mxu0 0.0
        %340 = vmatpush1.msra.mxu0 0.0
        %341 = vmatprep.subr.mxu0 0.0
        %342 = vmatpush1.msra.mxu0 0.0
        %343 = vmatprep.subr.mxu0 0.0
        %344 = vmatpush1.msra.mxu0 0.0
        %345 = vmatprep.subr.mxu0 0.0
        %346 = vmatpush1.msra.mxu0 0.0
        %347 = vmatprep.subr.mxu0 0.0
        %348 = vmatpush1.msra.mxu0 0.0
        %349 = vmatprep.subr.mxu0 0.0
        %350 = vmatpush1.msra.mxu0 0.0
        %351 = vmatprep.subr.mxu0 0.0
        %352 = vmatpush1.msra.mxu0 0.0
        %353 = vmatprep.subr.mxu0 0.0
        %354 = vmatpush1.msra.mxu0 0.0
        %355 = vmatprep.subr.mxu0 0.0
        %356 = vmatpush1.msra.mxu0 0.0
        %357 = vmatprep.subr.mxu0 0.0
        %358 = vmatpush1.msra.mxu0 0.0
        %359 = vmatprep.subr.mxu0 0.0
        %360 = vmatpush1.msra.mxu0 0.0
        %361 = vmatprep.subr.mxu0 0.0
        %362 = vmatpush1.msra.mxu0 0.0
        %363 = vmatprep.subr.mxu0 0.0
        %364 = vmatpush1.msra.mxu0 0.0
        %365 = vmatprep.subr.mxu0 0.0
        %366 = vmatpush1.msra.mxu0 0.0
        %367 = vmatprep.subr.mxu0 0.0
        %368 = vmatpush1.msra.mxu0 0.0
        %369 = vmatprep.subr.mxu0 0.0
        %370 = vmatpush1.msra.mxu0 0.0
        %371 = vmatprep.subr.mxu0 0.0
        %372 = vmatpush1.msra.mxu0 0.0
        %373 = vmatprep.subr.mxu0 0.0
        %374 = vmatpush1.msra.mxu0 0.0
        %375 = vmatprep.subr.mxu0 0.0
        %376 = vmatpush1.msra.mxu0 0.0
        %377 = vmatprep.subr.mxu0 0.0
        %378 = vmatpush1.msra.mxu0 0.0
        %379 = vmatprep.mubr.f32.mxu0 0.0
        %380 = vmatmul.mubr.f32.gmra.mrb[0].mxu0 %v309
        %v381 = vpop.f32.mrb[0].mxu0
        %v382 = vadd.f32 0.0, %v381
        %v383 = vpop.f32.mrb[0].mxu0
        %384 = vdwg.mxu0
        %v385 = vxor.u32 %v382, 2147483648
        %v386 = vmul.f32 %v385, 1.442695
        %v387 = vpow.pop %v386
        %v388 = vadd.f32 %v387, 1.0
        %v389 = vrcp.pop %v388
        %v390 = vmul.f32 1.0, %v389
        %v391 = vlaneseq
        %v392 = vshrl.u32 %v391, 7
        %v393 = vsub.s32 0, %v392
        %v394 = vrot.slane %v390, %v393
        %396 = vbcast.lane.b32.xlu0 %v394, 256
        %v397 = vpop.permute.xlu0 %396
        %v398 = vmul.f32 %v214, %v397
        %v399 = vmul.f32 %v215, %v397
        %400 = vst [vmem:[%s213] sm:$0xff] %v398
        %401 = vst [vmem:[%s213 + $0x8] sm:$0xff] %v399
        %s402 = sand.u32 %s118, 1
        %s403 = scalar_lea.sflag [#allocation4], %s402
        %s404 = sand.u32 %s118, 1
        %s405 = smul.addr %s404, 16
        %s406 = scalar_lea.vmem [#allocation5], %s405
        // Predicated region
        $region41: #{tpu_custom_call.1} parent=35 // pred_check
          %p407 = pneg %p128
        $region42: #{tpu_custom_call.1} parent=35 // pred_check_branch
          %409 = sbr.rel (%p407) target = $region44
        $region43: #{tpu_custom_call.1} parent=35 // pred_region
          %s411 = ssub.s32 256, 256
          %412 = vsyncadd %s403, %s411
          %s413 = smul.addr %s21, 2
          %s414 = smul.addr %s413, 128
          %s415 = scalar_lea.hbm %s4, %s414
          %s417 = sshll.u32 %s406, 4
          %s418 = int_to_ptr.vmem [resolvable:$true] %s417
          %420 = dma.vmem_to_hbm [thread:$0]  %s418, 256, %s415, %s403
        $region44: #{tpu_custom_call.1} parent=35 // pred_fallthru
          _
      $region36: #{tpu_custom_call.1} parent=5 // pred_fallthru
        _
      %p421 = scmp.le.s32.totalorder 2, %s16
      // Predicated region
      $region45: #{tpu_custom_call.1} parent=5 // pred_check
        %p422 = pneg %p421
      $region46: #{tpu_custom_call.1} parent=5 // pred_check_branch
        %424 = sbr.rel (%p422) target = $region48
      $region47: #{tpu_custom_call.1} parent=5 // pred_region
        %s425 = ssub.s32 %s16, 2
        // Predicated region
        $region49: #{tpu_custom_call.1} parent=47 // pred_check
          %p426 = pneg %p134
        $region50: #{tpu_custom_call.1} parent=47 // pred_check_branch
          %428 = sbr.rel (%p426) target = $region52
        $region51: #{tpu_custom_call.1} parent=47 // pred_region
          %s429 = sand.u32 %s119, 1
          %s430 = scalar_lea.sflag [#allocation4], %s429
          %s431 = sand.u32 %s119, 1
          %s432 = smul.addr %s431, 16
          %s433 = scalar_lea.vmem [#allocation5], %s432
          %434 = dma.done %s430, 256
        $region52: #{tpu_custom_call.1} parent=47 // pred_fallthru
          _
      $region48: #{tpu_custom_call.1} parent=5 // pred_fallthru
        _
    $region6: #{tpu_custom_call.1} parent=1 // loop_footer
      %s20 = sadd.s32 1, %s16
    $region7: #{tpu_custom_call.1} parent=1 // loop_footer_branch
      %15 = sbr.rel target = $region3
    $region8: #{tpu_custom_call.1} parent=1 // loop_exit
      _
    %435 = vsyncpa [#allocation3], 1
    %s436 = scalar_lea.sflag [#allocation3], 1
    %437 = vsyncpa %s436, 1
    %438 = vsyncpa [#allocation4], 1
    %s439 = scalar_lea.sflag [#allocation4], 1
    %440 = vsyncpa %s439, 1

</llo_original>
